<compile_context>
chip_gen: v7x
topology: tpu7x:2x2x1
jax: 0.10.0
libtpu: 0.0.40
codegen_flags: <defaults>
</compile_context>

<pallas_src>
import functools

import jax
import jax.numpy as jnp
from jax.experimental import pallas as pl
from jax.experimental.pallas import tpu as pltpu


def _round_up(x: int, m: int) -> int:
    return ((x + m - 1) // m) * m


def _vmem_budget_bytes() -> int:
    """~75% of physical VMEM (headroom for Mosaic internal scratch).

    v7x: 64 MiB/TC -> ~48 MiB budget; v5e/v6e: 128 MiB -> ~96 MiB budget.
    Falls back to a 48 MiB budget (safe on every generation) if the query
    is unavailable.
    """
    try:
        cap = int(pltpu.get_tpu_info().vmem_capacity_bytes)
    except Exception:  # pragma: no cover - conservative fallback
        cap = 64 * 1024 * 1024
    return (cap * 3) // 4


def _largest_aligned_divisor(n: int, cap: int, align: int) -> int:
    """Largest multiple of `align` that divides `n` and is <= min(cap, n).

    `n` is always a multiple of `align`, so `align` itself is a valid floor.
    """
    best = align
    t = align
    hi = min(cap, n)
    while t <= hi:
        if n % t == 0:
            best = t
        t += align
    return best


def _pick_tiles(batch: int, in_features: int, num_classes: int):
    """Tile sizes that (a) divide the minimally padded dims exactly, (b) fit
    the generation-aware VMEM budget when double-buffered in bf16, and (c)
    expose >=2 parallel blocks for v7x's two TensorCores when possible."""
    Bp = _round_up(batch, 8)
    Fp = _round_up(in_features, 128)
    Cp = _round_up(num_classes, 128)

    budget = _vmem_budget_bytes()
    big_vmem = budget >= 90 * 1024 * 1024  # v5e/v6e class (128 MiB physical)

    tm = _largest_aligned_divisor(Bp, 512, 8)
    tn = _largest_aligned_divisor(Cp, 2048 if big_vmem else 1024, 128)
    tk = _largest_aligned_divisor(Fp, 512, 128)

    # v7x megacore: if the whole output is one block, split a parallel axis so
    # both TensorCores get work (classes first — usually the larger axis).
    if Bp // tm == 1 and Cp // tn == 1:
        if Cp >= 256:
            tn = _largest_aligned_divisor(Cp, Cp // 2, 128)
        elif Bp >= 16:
            tm = _largest_aligned_divisor(Bp, Bp // 2, 8)

    return tm, tn, tk


def _linear_kernel(x_ref, w_ref, b_ref, o_ref):
    # x_ref: (tm, tk) bf16, w_ref: (tk, tn) bf16, b_ref: (1, tn) f32
    # o_ref: (tm, tn) f32 — resident across the K axis (block index (i, j) is
    # constant over k), so it doubles as the f32 accumulator.
    k = pl.program_id(2)

    @pl.when(k == 0)
    def _init():
        o_ref[...] = jnp.zeros_like(o_ref)

    o_ref[...] += jnp.dot(
        x_ref[...], w_ref[...], preferred_element_type=jnp.float32
    )

    @pl.when(k == pl.num_programs(2) - 1)
    def _finalize():
        # Bias added exactly once, fused into the K-epilogue.
        o_ref[...] += b_ref[...]


def prepare_classifier_params(weight, bias):
    """One-time parameter prep (do NOT call per forward step):
    transpose PyTorch-layout weight (C, F) -> (F, C), zero-pad F and C to
    multiples of 128, and cast the weight to bf16 so the hot path never
    re-lays-out or re-casts parameters.  Bias stays f32 (added post-MXU)."""
    C, F = weight.shape
    Fp, Cp = _round_up(F, 128), _round_up(C, 128)
    w_t = (
        jnp.zeros((Fp, Cp), jnp.float32).at[:F, :C].set(weight.T)
    ).astype(jnp.bfloat16)
    b2d = jnp.zeros((1, Cp), jnp.float32).at[0, :C].set(bias)
    # TODO(synk): for very large vocab classifiers on v7x, store fp8 weights
    # with per-column scales and dequantize in the K-epilogue instead.
    return w_t, b2d


@functools.partial(jax.jit, static_argnames=("num_classes", "tm", "tn", "tk"))
def classifier_forward(x, w_t_padded, b_padded, *, num_classes, tm, tn, tk):
    """x: (B, in_features) float; w_t_padded: (Fp, Cp) bf16 pre-transposed and
    padded; b_padded: (1, Cp) f32. Returns logits (B, num_classes) f32."""
    B, F = x.shape
    Fp, Cp = w_t_padded.shape
    Bp = _round_up(B, 8)

    # Guard against a tile/padding mismatch (would silently mis-index blocks).
    assert Fp % 128 == 0 and Cp % 128 == 0, "params not prepared (pad to 128)"
    assert Fp % tk == 0, f"tk={tk} must divide padded in_features {Fp}"
    assert Cp % tn == 0, f"tn={tn} must divide padded num_classes {Cp}"
    assert Bp % tm == 0, f"tm={tm} must divide padded batch {Bp}"
    assert Fp >= F and Cp >= num_classes

    # bf16 activation stream (f32 accumulation inside the kernel). Padding is
    # only needed when B % 8 != 0 or F % 128 != 0; the aligned common case is
    # a single cast with no re-materialization of x.
    if (Bp, Fp) != (B, F):
        xp = (
            jnp.zeros((Bp, Fp), jnp.float32)
            .at[:B, :F]
            .set(x.astype(jnp.float32))
        ).astype(jnp.bfloat16)
    else:
        xp = x.astype(jnp.bfloat16)

    gi, gj, gk = Bp // tm, Cp // tn, Fp // tk
    grid = (gi, gj, gk)

    # Live VMEM (bytes): double-buffered bf16 x/w tiles + f32 bias + the
    # resident f32 output block (double-buffered across (i, j) steps).
    live_bytes = (
        2 * (2 * tm * tk)      # x tiles, bf16
        + 2 * (2 * tk * tn)    # W^T tiles, bf16
        + 2 * (4 * tn)         # bias tiles, f32
        + 2 * (4 * tm * tn)    # output tiles, f32
    )
    vmem_limit = int(
        min(_vmem_budget_bytes(), max(2 * live_bytes, 16 * 1024 * 1024))
    )

    # Bytes reflect actual streaming: x is re-read per class-tile (gj times),
    # W^T is re-read per batch-tile (gi times), output written once.
    cost = pl.CostEstimate(
        flops=2 * Bp * Fp * Cp,
        transcendentals=0,
        bytes_accessed=(
            2 * Bp * Fp * gj      # x (bf16), re-streamed gj times
            + 2 * Fp * Cp * gi    # W^T (bf16), re-streamed gi times
            + 4 * Cp * gi         # bias (f32), re-streamed gi times
            + 4 * Bp * Cp         # output (f32), written once
        ),
    )

    out_padded = pl.pallas_call(
        _linear_kernel,
        out_shape=jax.ShapeDtypeStruct((Bp, Cp), jnp.float32),
        grid_spec=pltpu.PrefetchScalarGridSpec(
            num_scalar_prefetch=0,
            grid=grid,
            in_specs=[
                pl.BlockSpec((tm, tk), lambda i, j, k: (i, k)),   # x tile
                # TODO(synk): if profiling shows exposed DMA on the W^T stream
                # after enlarging tn, add pipeline_mode=pl.Buffered(3) here.
                pl.BlockSpec((tk, tn), lambda i, j, k: (k, j)),   # W^T tile
                pl.BlockSpec((1, tn), lambda i, j, k: (0, j)),    # bias tile
            ],
            out_specs=pl.BlockSpec((tm, tn), lambda i, j, k: (i, j)),
        ),
        compiler_params=pltpu.CompilerParams(
            dimension_semantics=("parallel", "parallel", "arbitrary"),
            vmem_limit_bytes=vmem_limit,
        ),
        cost_estimate=cost,
    )(xp, w_t_padded, b_padded)

    return out_padded[:B, :num_classes]


if __name__ == "__main__":
    # Small shapes consistent with the module: Linear(in_features=32, num_classes=8)
    batch, in_features, num_classes = 8, 32, 8

    key = jax.random.PRNGKey(0)
    kx, kw, kb = jax.random.split(key, 3)

    # Deterministic "PyTorch-style" init: U(-1/sqrt(in), 1/sqrt(in))
    bound = 1.0 / (in_features ** 0.5)
    weight = jax.random.uniform(
        kw, (num_classes, in_features), jnp.float32, -bound, bound)
    bias = jax.random.uniform(
        kb, (num_classes,), jnp.float32, -bound, bound)
    x = jax.random.normal(kx, (batch, in_features), jnp.float32)

    tm, tn, tk = _pick_tiles(batch, in_features, num_classes)
    # One-time parameter prep (transpose + pad + bf16 cast); reuse across calls.
    w_t, b2d = prepare_classifier_params(weight, bias)

    logits = classifier_forward(
        x, w_t, b2d, num_classes=num_classes, tm=tm, tn=tn, tk=tk)
    logits = jax.block_until_ready(logits)

    # Reference checks.
    assert logits.shape == (batch, num_classes)
    # (a) against an f32 reference with a bf16-appropriate tolerance.
    ref_f32 = x @ weight.T + bias
    assert jnp.allclose(logits, ref_f32, atol=2e-2, rtol=2e-2)
    # (b) against a bf16-input / f32-accumulate emulation with tight tolerance.
    ref_bf16 = (
        x.astype(jnp.bfloat16).astype(jnp.float32)
        @ weight.astype(jnp.bfloat16).astype(jnp.float32).T
        + bias
    )
    assert jnp.allclose(logits, ref_bf16, atol=1e-4, rtol=1e-4)

    print("KERNEL_OK")
</pallas_src>

<mosaic_0001>
module attributes {stable_mosaic.version = 11 : i64} {
  func.func @_linear_kernel(%arg0: i32, %arg1: i32, %arg2: i32, %arg3: memref<8x128xbf16, #tpu.memory_space<vmem>>, %arg4: memref<128x128xbf16, #tpu.memory_space<vmem>>, %arg5: memref<1x128xf32, #tpu.memory_space<vmem>>, %arg6: memref<8x128xf32, #tpu.memory_space<vmem>>) attributes {dimension_semantics = [#tpu.dimension_semantics<parallel>, #tpu.dimension_semantics<parallel>, #tpu.dimension_semantics<arbitrary>], iteration_bounds = array<i64: 1, 1, 1>, scalar_prefetch = 0 : i64, scratch_operands = 0 : i64, tpu.core_type = #tpu.core_type<tc>, window_params = [{transform_indices = @transform_0, window_bounds = array<i64: 8, 128>}, {transform_indices = @transform_1, window_bounds = array<i64: 128, 128>}, {transform_indices = @transform_2, window_bounds = array<i64: 1, 128>}, {transform_indices = @transform_3, window_bounds = array<i64: 8, 128>}]} {
    %c0_i32 = arith.constant 0 : i32
    %0 = arith.cmpi eq, %arg2, %c0_i32 : i32
    %1 = arith.extui %0 : i1 to i32
    %c0_i32_0 = arith.constant 0 : i32
    %2 = arith.cmpi ne, %1, %c0_i32_0 : i32
    scf.if %2 {
      %cst_10 = arith.constant 0.000000e+00 : f32
      %12 = vector.broadcast %cst_10 : f32 to vector<8x128xf32>
      %c0_11 = arith.constant 0 : index
      %c0_12 = arith.constant 0 : index
      %13 = vector.load %arg6[%c0_11, %c0_12] : memref<8x128xf32, #tpu.memory_space<vmem>>, vector<8x128xf32>
      tpu.vector_store %arg6[%c0_11, %c0_12], %12 {strides = array<i32>} : memref<8x128xf32, #tpu.memory_space<vmem>>, vector<8x128xf32>,
    } else {
    }
    %c0 = arith.constant 0 : index
    %c0_1 = arith.constant 0 : index
    %3 = vector.load %arg6[%c0, %c0_1] : memref<8x128xf32, #tpu.memory_space<vmem>>, vector<8x128xf32>
    %c0_2 = arith.constant 0 : index
    %c0_3 = arith.constant 0 : index
    %4 = vector.load %arg3[%c0_2, %c0_3] : memref<8x128xbf16, #tpu.memory_space<vmem>>, vector<8x128xbf16>
    %c0_4 = arith.constant 0 : index
    %c0_5 = arith.constant 0 : index
    %5 = vector.load %arg4[%c0_4, %c0_5] : memref<128x128xbf16, #tpu.memory_space<vmem>>, vector<128x128xbf16>
    %cst = arith.constant dense<0.000000e+00> : vector<8x128xf32>
    %6 = tpu.matmul %4, %5, %cst {dimension_numbers = #tpu.dot_dimension_numbers<[1], [0], [0], [1], [0, 0, 1, 1], [], []>} : vector<8x128xbf16>, vector<128x128xbf16>, vector<8x128xf32> -> vector<8x128xf32>
    %7 = arith.addf %3, %6 : vector<8x128xf32>
    %c0_6 = arith.constant 0 : index
    %c0_7 = arith.constant 0 : index
    %8 = vector.load %arg6[%c0_6, %c0_7] : memref<8x128xf32, #tpu.memory_space<vmem>>, vector<8x128xf32>
    tpu.vector_store %arg6[%c0_6, %c0_7], %7 {strides = array<i32>} : memref<8x128xf32, #tpu.memory_space<vmem>>, vector<8x128xf32>,
    %c0_i32_8 = arith.constant 0 : i32
    %9 = arith.cmpi eq, %arg2, %c0_i32_8 : i32
    %10 = arith.extui %9 : i1 to i32
    %c0_i32_9 = arith.constant 0 : i32
    %11 = arith.cmpi ne, %10, %c0_i32_9 : i32
    scf.if %11 {
      %c0_10 = arith.constant 0 : index
      %c0_11 = arith.constant 0 : index
      %12 = vector.load %arg6[%c0_10, %c0_11] : memref<8x128xf32, #tpu.memory_space<vmem>>, vector<8x128xf32>
      %c0_12 = arith.constant 0 : index
      %c0_13 = arith.constant 0 : index
      %13 = vector.load %arg5[%c0_12, %c0_13] : memref<1x128xf32, #tpu.memory_space<vmem>>, vector<1x128xf32>
      %14 = vector.broadcast %13 : vector<1x128xf32> to vector<8x128xf32>
      %15 = arith.addf %12, %14 : vector<8x128xf32>
      %c0_14 = arith.constant 0 : index
      %c0_15 = arith.constant 0 : index
      %16 = vector.load %arg6[%c0_14, %c0_15] : memref<8x128xf32, #tpu.memory_space<vmem>>, vector<8x128xf32>
      tpu.vector_store %arg6[%c0_14, %c0_15], %15 {strides = array<i32>} : memref<8x128xf32, #tpu.memory_space<vmem>>, vector<8x128xf32>,
    } else {
    }
    return
  }
  func.func @transform_0(%arg0: i32, %arg1: i32, %arg2: i32) -> (i32, i32) {
    %c0_i32 = arith.constant 0 : i32
    return %arg0, %arg2 : i32, i32
  }
  func.func @transform_1(%arg0: i32, %arg1: i32, %arg2: i32) -> (i32, i32) {
    %c0_i32 = arith.constant 0 : i32
    return %arg2, %arg1 : i32, i32
  }
  func.func @transform_2(%arg0: i32, %arg1: i32, %arg2: i32) -> (i32, i32) {
    %c0_i32 = arith.constant 0 : i32
    %c0_i32_0 = arith.constant 0 : i32
    return %c0_i32, %arg1 : i32, i32
  }
  func.func @transform_3(%arg0: i32, %arg1: i32, %arg2: i32) -> (i32, i32) {
    %c0_i32 = arith.constant 0 : i32
    return %arg0, %arg1 : i32, i32
  }
}

</mosaic_0001>

<llo_original>
// kernel: classifier_forward.1
$region0: #{classifier_forward.1}
  #allocation0 [shape = 'u32[]', space=smem, size = 0x4, offset = 0x4, fixed_abs, tag = 'smem constant byte address 0x4 - core index']
  #allocation1 [shape = 'u32[144,128]{1,0:T(1,128)}', space=vmem, size = 0x12000, scoped, tag = 'internal scratch']
  %s0 = inlined_call_operand.vmem [shape: bf16[8,128], index: 0, kind: input, shape index: {}]
  %s1 = inlined_call_operand.hbm [shape: bf16[128,128], index: 1, kind: input, shape index: {}]
  %s2 = inlined_call_operand.vmem [shape: f32[1,128], index: 2, kind: input, shape index: {}]
  %s3 = inlined_call_operand.hbm [shape: f32[8,128], index: 3, kind: output, shape index: {}]
  %s4 = sld [smem:[#allocation0]]
  $region34: #{classifier_forward.1} parent=0
    _
  %s6 = ssub.s32 1, %s4
  %s7 = scalar_select 0, %s6, %s4
  $region1: #{classifier_forward.1} parent=0
    #allocation2 [shape = 'u8[32768]{0}', space=vmem, size = 0x8000, scoped, tag = 'input window, operand 1, single buffered']
    #allocation3 [shape = 's32[1]{0}', space=sflag, size = 0x4, scoped, tag = 'scoped memory for classifier_forward.1']
    #allocation4 [shape = 's32[1]{0}', space=sflag, size = 0x4, scoped, tag = 'scoped memory for classifier_forward.1']
    #allocation5 [shape = 'u8[4096]{0}', space=vmem, size = 0x1000, scoped, tag = 'output window, operand 0, single buffered']
    %8 = vsyncpa [#allocation3], 0
    %9 = vsyncpa [#allocation4], 0
    // Predicated region
    $region2: #{classifier_forward.1} parent=1 // pred_check
      _
    $region3: #{classifier_forward.1} parent=1 // pred_check_branch
      %11 = sbr.rel (0) target = $region5
    $region4: #{classifier_forward.1} parent=1 // pred_region
      _
    $region5: #{classifier_forward.1} parent=1 // pred_fallthru
      _
    // Predicated region
    $region6: #{classifier_forward.1} parent=1 // pred_check
      _
    $region7: #{classifier_forward.1} parent=1 // pred_check_branch
      %13 = sbr.rel (0) target = $region9
    $region8: #{classifier_forward.1} parent=1 // pred_region
      %s15 = ssub.s32 1024, 1024
      %16 = vsyncadd [#allocation3], %s15
      %s17 = sshll.u32 [#allocation2], 4
      %s18 = int_to_ptr.vmem [resolvable:$true] %s17
      %23 = dma.hbm_to_vmem [thread:$0]  %s1, 1024, %s18, [#allocation3], 64, 64, 4
    $region9: #{classifier_forward.1} parent=1 // pred_fallthru
      _
    // Predicated region
    $region10: #{classifier_forward.1} parent=1 // pred_check
      _
    $region11: #{classifier_forward.1} parent=1 // pred_check_branch
      %25 = sbr.rel (0) target = $region13
    $region12: #{classifier_forward.1} parent=1 // pred_region
      _
    $region13: #{classifier_forward.1} parent=1 // pred_fallthru
      _
    // Predicated region
    $region14: #{classifier_forward.1} parent=1 // pred_check
      _
    $region15: #{classifier_forward.1} parent=1 // pred_check_branch
      %27 = sbr.rel (0) target = $region17
    $region16: #{classifier_forward.1} parent=1 // pred_region
      %28 = dma.done [#allocation3], 1024
    $region17: #{classifier_forward.1} parent=1 // pred_fallthru
      _
    %p30 = scmp.eq.s32.totalorder 0, 0
    // Predicated region
    $region18: #{classifier_forward.1} parent=1 // pred_check
      %p31 = pneg %p30
    $region19: #{classifier_forward.1} parent=1 // pred_check_branch
      %33 = sbr.rel (%p31) target = $region21
    $region20: #{classifier_forward.1} parent=1 // pred_region
      %34 = vst [vmem:[#allocation5] sm:$0xff] 0.0
    $region21: #{classifier_forward.1} parent=1 // pred_fallthru
      _
    %v35 = vld [vmem:[#allocation5] sm:$0xff]
    %v36 = vld [vmem:[%s0] sm:$0xf]
    %v37 = vld [vmem:[#allocation2] sm:$0xf]
    %v38 = vld [vmem:[#allocation2 + $0x4] sm:$0xf]
    %v39 = vld [vmem:[#allocation2 + $0x8] sm:$0xf]
    %v40 = vld [vmem:[#allocation2 + $0xc] sm:$0xf]
    %v41 = vld [vmem:[#allocation2 + $0x10] sm:$0xf]
    %v42 = vld [vmem:[#allocation2 + $0x14] sm:$0xf]
    %v43 = vld [vmem:[#allocation2 + $0x18] sm:$0xf]
    %v44 = vld [vmem:[#allocation2 + $0x1c] sm:$0xf]
    %v45 = vld [vmem:[#allocation2 + $0x20] sm:$0xf]
    %v46 = vld [vmem:[#allocation2 + $0x24] sm:$0xf]
    %v47 = vld [vmem:[#allocation2 + $0x28] sm:$0xf]
    %v48 = vld [vmem:[#allocation2 + $0x2c] sm:$0xf]
    %v49 = vld [vmem:[#allocation2 + $0x30] sm:$0xf]
    %v50 = vld [vmem:[#allocation2 + $0x34] sm:$0xf]
    %v51 = vld [vmem:[#allocation2 + $0x38] sm:$0xf]
    %v52 = vld [vmem:[#allocation2 + $0x3c] sm:$0xf]
    %v69 = vunpack.c.l.b16 %v37
    %v70 = vunpack.c.l.b16 %v38
    %v71 = vunpack.c.l.b16 %v39
    %v72 = vunpack.c.l.b16 %v40
    %v73 = vunpack.c.l.b16 %v41
    %v74 = vunpack.c.l.b16 %v42
    %v75 = vunpack.c.l.b16 %v43
    %v76 = vunpack.c.l.b16 %v44
    %v77 = vunpack.c.l.b16 %v45
    %v78 = vunpack.c.l.b16 %v46
    %v79 = vunpack.c.l.b16 %v47
    %v80 = vunpack.c.l.b16 %v48
    %v81 = vunpack.c.l.b16 %v49
    %v82 = vunpack.c.l.b16 %v50
    %v83 = vunpack.c.l.b16 %v51
    %v84 = vunpack.c.l.b16 %v52
    %v85 = vpack.c.b16 %v70, %v69
    %v86 = vpack.c.b16 %v72, %v71
    %v87 = vpack.c.b16 %v74, %v73
    %v88 = vpack.c.b16 %v76, %v75
    %v89 = vpack.c.b16 %v78, %v77
    %v90 = vpack.c.b16 %v80, %v79
    %v91 = vpack.c.b16 %v82, %v81
    %v92 = vpack.c.b16 %v84, %v83
    %101 = vmatprep.subr.bf16.mxu0 0
    %102 = vmatpush1.bf16.msra.mxu0 %v85
    %103 = vmatprep.subr.bf16.mxu0 0
    %104 = vmatpush1.bf16.msra.mxu0 %v86
    %105 = vmatprep.subr.bf16.mxu0 0
    %106 = vmatpush1.bf16.msra.mxu0 %v87
    %107 = vmatprep.subr.bf16.mxu0 0
    %108 = vmatpush1.bf16.msra.mxu0 %v88
    %109 = vmatprep.subr.bf16.mxu0 0
    %110 = vmatpush1.bf16.msra.mxu0 %v89
    %111 = vmatprep.subr.bf16.mxu0 0
    %112 = vmatpush1.bf16.msra.mxu0 %v90
    %113 = vmatprep.subr.bf16.mxu0 0
    %114 = vmatpush1.bf16.msra.mxu0 %v91
    %115 = vmatprep.subr.bf16.mxu0 0
    %116 = vmatpush1.bf16.msra.mxu0 %v92
    %117 = vmatprep.subr.bf16.mxu0 0
    %118 = vmatpush1.bf16.msra.mxu0 0
    %119 = vmatprep.subr.bf16.mxu0 0
    %120 = vmatpush1.bf16.msra.mxu0 0
    %121 = vmatprep.subr.bf16.mxu0 0
    %122 = vmatpush1.bf16.msra.mxu0 0
    %123 = vmatprep.subr.bf16.mxu0 0
    %124 = vmatpush1.bf16.msra.mxu0 0
    %125 = vmatprep.subr.bf16.mxu0 0
    %126 = vmatpush1.bf16.msra.mxu0 0
    %127 = vmatprep.subr.bf16.mxu0 0
    %128 = vmatpush1.bf16.msra.mxu0 0
    %129 = vmatprep.subr.bf16.mxu0 0
    %130 = vmatpush1.bf16.msra.mxu0 0
    %131 = vmatprep.subr.bf16.mxu0 0
    %132 = vmatpush1.bf16.msra.mxu0 0
    %133 = vmatprep.mubr.bf16.mxu0 0
    %134 = vmatmul.mubr.bf16.gmra.mrb[0].mxu0 %v36
    %v135 = vpop.f32.mrb[0].mxu0
    %v136 = vadd.f32 0.0, %v135
    %v137 = vpop.f32.mrb[0].mxu0
    %v138 = vpop.f32.mrb[0].mxu0
    %v139 = vpop.f32.mrb[0].mxu0
    %140 = vdwg.mxu0
    %v141 = vadd.f32 %v35, %v136
    %142 = vst [vmem:[#allocation5] sm:$0xff] %v141
    // Predicated region
    $region22: #{classifier_forward.1} parent=1 // pred_check
      %p143 = pneg %p30
    $region23: #{classifier_forward.1} parent=1 // pred_check_branch
      %145 = sbr.rel (%p143) target = $region25
    $region24: #{classifier_forward.1} parent=1 // pred_region
      %v146 = vld [vmem:[#allocation5] sm:$0xff]
      %v147 = vld [vmem:[%s2] sm:$0x1]
      %v149 = vlaneseq
      %v150 = vshrl.u32 %v149, 7
      %v151 = vsub.s32 0, %v150
      %v152 = vrot.slane %v147, %v151
      %v154 = vadd.f32 %v146, %v152
      %155 = vst [vmem:[#allocation5] sm:$0xff] %v154
    $region25: #{classifier_forward.1} parent=1 // pred_fallthru
      _
    // Predicated region
    $region26: #{classifier_forward.1} parent=1 // pred_check
      _
    $region27: #{classifier_forward.1} parent=1 // pred_check_branch
      %157 = sbr.rel (0) target = $region29
    $region28: #{classifier_forward.1} parent=1 // pred_region
      %s159 = ssub.s32 128, 128
      %160 = vsyncadd [#allocation4], %s159
      %s162 = sshll.u32 [#allocation5], 4
      %s163 = int_to_ptr.vmem [resolvable:$true] %s162
      %165 = dma.vmem_to_hbm [thread:$0]  %s163, 128, %s3, [#allocation4]
    $region29: #{classifier_forward.1} parent=1 // pred_fallthru
      _
    // Predicated region
    $region30: #{classifier_forward.1} parent=1 // pred_check
      _
    $region31: #{classifier_forward.1} parent=1 // pred_check_branch
      %167 = sbr.rel (0) target = $region33
    $region32: #{classifier_forward.1} parent=1 // pred_region
      %168 = dma.done [#allocation4], 128
    $region33: #{classifier_forward.1} parent=1 // pred_fallthru
      _
    %169 = vsyncpa [#allocation3], 1
    %170 = vsyncpa [#allocation4], 1

</llo_original>
